<compile_context>
chip_gen: v5e
topology: v5e:2x2
jax: 0.10.0
libtpu: 0.0.40
codegen_flags: <defaults>
</compile_context>

<pallas_src>
import math
from functools import partial

import jax
import jax.numpy as jnp
from jax.experimental import pallas as pl
from jax.experimental.pallas import tpu as pltpu


def _mha_kernel(q_ref, k_ref, v_ref, bias_ref,
                wqkv_ref, bqkv_ref, wo_ref, bo_ref,
                out_ref, prob_ref,
                acc_ref,
                *, scale):
    """Grid = (batch, head). One (batch, head) pair per grid step.

    q_ref/k_ref/v_ref : (1, S, H) f32        (same block across heads -> no re-DMA)
    bias_ref          : (1, S, S) bf16       additive mask bias (-1e9 at masked)
    wqkv_ref          : (3, 1, H, d_head) bf16   stacked head-major Wq/Wk/Wv
    bqkv_ref          : (3, 1, 1, d_head) f32    stacked bq/bk/bv
    wo_ref            : (1, d_head, H) bf16
    bo_ref            : (1, H) f32
    out_ref           : (1, S, H) f32        (resident across the head axis)
    prob_ref          : (1, n_head, S, S) f32 (resident across the head axis)
    acc_ref           : (S, H) f32 VMEM scratch (output-projection accumulator)
    """
    h = pl.program_id(1)
    bf16 = jnp.bfloat16
    f32 = jnp.float32

    @pl.when(h == 0)
    def _():
        acc_ref[...] = jnp.zeros_like(acc_ref)

    q = q_ref[0].astype(bf16)            # (S, H)
    k = k_ref[0].astype(bf16)
    v = v_ref[0].astype(bf16)

    # Per-head input projections (MXU, bf16 operands, f32 accumulation).
    qh = jnp.dot(q, wqkv_ref[0, 0], preferred_element_type=f32) + bqkv_ref[0, 0]
    kh = jnp.dot(k, wqkv_ref[1, 0], preferred_element_type=f32) + bqkv_ref[1, 0]
    vh = jnp.dot(v, wqkv_ref[2, 0], preferred_element_type=f32) + bqkv_ref[2, 0]

    # scores = (qh @ kh^T) * scale + mask_bias  -- contract d_head, no explicit .T.
    scores = jax.lax.dot_general(
        qh.astype(bf16), kh.astype(bf16),
        dimension_numbers=(((1,), (1,)), ((), ())),
        preferred_element_type=f32)                                      # (S, S)
    scores = scores * scale + bias_ref[0].astype(f32)

    # softmax(dim=-1); exp on EUP, normalisation via approx reciprocal (EUP).
    m = jnp.max(scores, axis=-1, keepdims=True)
    e = jnp.exp(scores - m)
    p = e * pl.reciprocal(jnp.sum(e, axis=-1, keepdims=True), approx=True)

    # Write this head's slice into the batch-resident prob block.
    prob_ref[0, h] = p.astype(prob_ref.dtype)

    # Context for this head and its contribution to the output projection.
    ctx = jnp.dot(p.astype(bf16), vh.astype(bf16), preferred_element_type=f32)
    acc_ref[...] += jnp.dot(ctx.astype(bf16), wo_ref[0], preferred_element_type=f32)

    @pl.when(h == pl.num_programs(1) - 1)
    def _():
        out_ref[0] = (acc_ref[...] + bo_ref[...]).astype(out_ref.dtype)


def multi_head_attention(Q, K, V, attn_mask, params, *, n_head, d_head):
    """Pallas-backed forward. Q/K/V: (B, S, H) f32; attn_mask: (B, S, S) bool."""
    B, S, H = Q.shape
    scale = 1.0 / math.sqrt(d_head)

    # Wrapper-side layout plumbing (once per call): head-major, bf16 weights.
    to_heads_in = lambda W: W.reshape(H, n_head, d_head).transpose(1, 0, 2)
    wqkv = jnp.stack([to_heads_in(params["Wq"]),
                      to_heads_in(params["Wk"]),
                      to_heads_in(params["Wv"])]).astype(jnp.bfloat16)   # (3, n_head, H, d_head)
    bqkv = jnp.stack([params["bq"].reshape(n_head, 1, d_head),
                      params["bk"].reshape(n_head, 1, d_head),
                      params["bv"].reshape(n_head, 1, d_head)])          # (3, n_head, 1, d_head) f32
    wo = params["Wo"].reshape(n_head, d_head, H).astype(jnp.bfloat16)    # (n_head, d_head, H)
    bo = params["bo"]                                                    # (1, H) f32

    # Additive mask bias in bf16 (half the HBM->VMEM bytes of an int32 mask).
    bias = jnp.where(attn_mask, jnp.float32(-1e9),
                     jnp.float32(0.0)).astype(jnp.bfloat16)

    kernel = partial(_mha_kernel, scale=scale)

    qkv_spec = pl.BlockSpec((1, S, H), lambda b, h: (b, 0, 0))
    bias_spec = pl.BlockSpec((1, S, S), lambda b, h: (b, 0, 0))
    wqkv_spec = pl.BlockSpec((3, 1, H, d_head), lambda b, h: (0, h, 0, 0))
    bqkv_spec = pl.BlockSpec((3, 1, 1, d_head), lambda b, h: (0, h, 0, 0))
    wo_spec = pl.BlockSpec((1, d_head, H), lambda b, h: (h, 0, 0))
    bo_spec = pl.BlockSpec((1, H), lambda b, h: (0, 0))

    out, prob = pl.pallas_call(
        kernel,
        grid_spec=pltpu.PrefetchScalarGridSpec(
            num_scalar_prefetch=0,
            grid=(B, n_head),
            in_specs=[qkv_spec, qkv_spec, qkv_spec, bias_spec,
                      wqkv_spec, bqkv_spec, wo_spec, bo_spec],
            out_specs=[pl.BlockSpec((1, S, H), lambda b, h: (b, 0, 0)),
                       pl.BlockSpec((1, n_head, S, S), lambda b, h: (b, 0, 0, 0))],
            scratch_shapes=[pltpu.VMEM((S, H), jnp.float32)],
        ),
        out_shape=[jax.ShapeDtypeStruct((B, S, H), jnp.float32),
                   jax.ShapeDtypeStruct((B, n_head, S, S), jnp.float32)],
        compiler_params=pltpu.CompilerParams(
            dimension_semantics=("parallel", "arbitrary")),
    )(Q, K, V, bias, wqkv, bqkv, wo, bo)
    return out, prob


def _reference(Q, K, V, attn_mask, params, *, n_head, d_head):
    """Pure-JAX f32 reference mirroring the PyTorch forward (eval mode)."""
    B, S, H = Q.shape
    scale = 1.0 / math.sqrt(d_head)
    proj = lambda x, W, b: x @ W + b
    q_s = proj(Q, params["Wq"], params["bq"]).reshape(B, S, n_head, d_head).transpose(0, 2, 1, 3)
    k_s = proj(K, params["Wk"], params["bk"]).reshape(B, S, n_head, d_head).transpose(0, 2, 1, 3)
    v_s = proj(V, params["Wv"], params["bv"]).reshape(B, S, n_head, d_head).transpose(0, 2, 1, 3)
    scores = jnp.einsum("bhqd,bhkd->bhqk", q_s, k_s) * scale
    mask = attn_mask[:, None, :, :]
    scores = jnp.where(mask, -1e9, scores)
    prob = jax.nn.softmax(scores, axis=-1)
    ctx = jnp.einsum("bhqk,bhkd->bhqd", prob, v_s)
    ctx = ctx.transpose(0, 2, 1, 3).reshape(B, S, n_head * d_head)
    out = ctx @ params["Wo"] + params["bo"]
    return out, prob


if __name__ == "__main__":
    # Small config consistent with the module: hidden=32, n_head=4, d_head=8.
    B, S, H = 2, 8, 32
    n_head, d_head = 4, 8
    NHD = n_head * d_head

    key = jax.random.PRNGKey(0)
    keys = jax.random.split(key, 12)

    def init_lin(kw, kb, fan_in, fan_out):
        bound = 1.0 / math.sqrt(fan_in)
        W = jax.random.uniform(kw, (fan_in, fan_out), jnp.float32, -bound, bound)
        b = jax.random.uniform(kb, (1, fan_out), jnp.float32, -bound, bound)
        return W, b

    Wq, bq = init_lin(keys[0], keys[1], H, NHD)
    Wk, bk = init_lin(keys[2], keys[3], H, NHD)
    Wv, bv = init_lin(keys[4], keys[5], H, NHD)
    Wo, bo = init_lin(keys[6], keys[7], NHD, H)
    params = dict(Wq=Wq, bq=bq, Wk=Wk, bk=bk, Wv=Wv, bv=bv, Wo=Wo, bo=bo)

    Qx = jax.random.normal(keys[8], (B, S, H), jnp.float32)
    Kx = jax.random.normal(keys[9], (B, S, H), jnp.float32)
    Vx = jax.random.normal(keys[10], (B, S, H), jnp.float32)
    # Causal attention mask (True = masked), as typical for a decoder.
    causal = jnp.triu(jnp.ones((S, S), jnp.bool_), k=1)
    attn_mask = jnp.broadcast_to(causal, (B, S, S))

    out, prob = multi_head_attention(Qx, Kx, Vx, attn_mask, params,
                                     n_head=n_head, d_head=d_head)
    out = jax.block_until_ready(out)
    prob = jax.block_until_ready(prob)

    ref_out, ref_prob = _reference(Qx, Kx, Vx, attn_mask, params,
                                   n_head=n_head, d_head=d_head)
    # bf16 MXU operands + approx reciprocal => bf16-level tolerances vs f32 ref.
    assert jnp.allclose(out, ref_out, atol=2e-2, rtol=2e-2), "output mismatch"
    assert jnp.allclose(prob, ref_prob, atol=2e-2, rtol=2e-2), "attn_prob mismatch"

    print("KERNEL_OK")
</pallas_src>

<mosaic_0001>
module attributes {stable_mosaic.version = 11 : i64} {
  func.func @_mha_kernel(%arg0: i32, %arg1: i32, %arg2: memref<1x8x32xf32, #tpu.memory_space<vmem>>, %arg3: memref<1x8x32xf32, #tpu.memory_space<vmem>>, %arg4: memref<1x8x32xf32, #tpu.memory_space<vmem>>, %arg5: memref<1x8x8xbf16, #tpu.memory_space<vmem>>, %arg6: memref<3x1x32x8xbf16, #tpu.memory_space<vmem>>, %arg7: memref<3x1x1x8xf32, #tpu.memory_space<vmem>>, %arg8: memref<1x8x32xbf16, #tpu.memory_space<vmem>>, %arg9: memref<1x32xf32, #tpu.memory_space<vmem>>, %arg10: memref<1x8x32xf32, #tpu.memory_space<vmem>>, %arg11: memref<1x4x8x8xf32, #tpu.memory_space<vmem>>, %arg12: memref<8x32xf32, #tpu.memory_space<vmem>>) attributes {dimension_semantics = [#tpu.dimension_semantics<parallel>, #tpu.dimension_semantics<arbitrary>], iteration_bounds = array<i64: 2, 4>, scalar_prefetch = 0 : i64, scratch_operands = 1 : i64, tpu.core_type = #tpu.core_type<tc>, window_params = [{transform_indices = @transform_0, window_bounds = array<i64: 1, 8, 32>}, {transform_indices = @transform_1, window_bounds = array<i64: 1, 8, 32>}, {transform_indices = @transform_2, window_bounds = array<i64: 1, 8, 32>}, {transform_indices = @transform_3, window_bounds = array<i64: 1, 8, 8>}, {transform_indices = @transform_4, window_bounds = array<i64: 3, 1, 32, 8>}, {transform_indices = @transform_5, window_bounds = array<i64: 3, 1, 1, 8>}, {transform_indices = @transform_6, window_bounds = array<i64: 1, 8, 32>}, {pipeline_mode = #tpu.pipeline_mode<synchronous>, transform_indices = @transform_7, window_bounds = array<i64: 1, 32>}, {transform_indices = @transform_8, window_bounds = array<i64: 1, 8, 32>}, {transform_indices = @transform_9, window_bounds = array<i64: 1, 4, 8, 8>}]} {
    %c0_i32 = arith.constant 0 : i32
    %0 = arith.cmpi eq, %arg1, %c0_i32 : i32
    %1 = arith.extui %0 : i1 to i32
    %c0_i32_0 = arith.constant 0 : i32
    %2 = arith.cmpi ne, %1, %c0_i32_0 : i32
    scf.if %2 {
      %cst_53 = arith.constant 0.000000e+00 : f32
      %69 = vector.broadcast %cst_53 : f32 to vector<8x32xf32>
      %c0_54 = arith.constant 0 : index
      %c0_55 = arith.constant 0 : index
      %70 = vector.load %arg12[%c0_54, %c0_55] : memref<8x32xf32, #tpu.memory_space<vmem>>, vector<8x32xf32>
      tpu.vector_store %arg12[%c0_54, %c0_55], %69 {strides = array<i32>} : memref<8x32xf32, #tpu.memory_space<vmem>>, vector<8x32xf32>,
    } else {
    }
    %c0 = arith.constant 0 : index
    %c0_1 = arith.constant 0 : index
    %c0_2 = arith.constant 0 : index
    %3 = vector.load %arg2[%c0, %c0_1, %c0_2] : memref<1x8x32xf32, #tpu.memory_space<vmem>>, vector<1x8x32xf32>
    %4 = vector.shape_cast %3 : vector<1x8x32xf32> to vector<8x32xf32>
    %5 = arith.truncf %4 : vector<8x32xf32> to vector<8x32xbf16>
    %c0_3 = arith.constant 0 : index
    %c0_4 = arith.constant 0 : index
    %c0_5 = arith.constant 0 : index
    %6 = vector.load %arg3[%c0_3, %c0_4, %c0_5] : memref<1x8x32xf32, #tpu.memory_space<vmem>>, vector<1x8x32xf32>
    %7 = vector.shape_cast %6 : vector<1x8x32xf32> to vector<8x32xf32>
    %8 = arith.truncf %7 : vector<8x32xf32> to vector<8x32xbf16>
    %c0_6 = arith.constant 0 : index
    %c0_7 = arith.constant 0 : index
    %c0_8 = arith.constant 0 : index
    %9 = vector.load %arg4[%c0_6, %c0_7, %c0_8] : memref<1x8x32xf32, #tpu.memory_space<vmem>>, vector<1x8x32xf32>
    %10 = vector.shape_cast %9 : vector<1x8x32xf32> to vector<8x32xf32>
    %11 = arith.truncf %10 : vector<8x32xf32> to vector<8x32xbf16>
    %c0_9 = arith.constant 0 : index
    %c0_10 = arith.constant 0 : index
    %c0_11 = arith.constant 0 : index
    %c0_12 = arith.constant 0 : index
    %12 = vector.load %arg6[%c0_9, %c0_10, %c0_11, %c0_12] : memref<3x1x32x8xbf16, #tpu.memory_space<vmem>>, vector<1x1x32x8xbf16>
    %13 = vector.shape_cast %12 : vector<1x1x32x8xbf16> to vector<32x8xbf16>
    %cst = arith.constant dense<0.000000e+00> : vector<8x8xf32>
    %14 = tpu.matmul %5, %13, %cst {dimension_numbers = #tpu.dot_dimension_numbers<[1], [0], [0], [1], [0, 0, 1, 1], [], []>} : vector<8x32xbf16>, vector<32x8xbf16>, vector<8x8xf32> -> vector<8x8xf32>
    %c0_13 = arith.constant 0 : index
    %c0_14 = arith.constant 0 : index
    %c0_15 = arith.constant 0 : index
    %c0_16 = arith.constant 0 : index
    %15 = vector.load %arg7[%c0_13, %c0_14, %c0_15, %c0_16] : memref<3x1x1x8xf32, #tpu.memory_space<vmem>>, vector<1x1x1x8xf32>
    %16 = vector.shape_cast %15 : vector<1x1x1x8xf32> to vector<1x8xf32>
    %17 = vector.broadcast %16 : vector<1x8xf32> to vector<8x8xf32>
    %18 = arith.addf %14, %17 : vector<8x8xf32>
    %c1 = arith.constant 1 : index
    %c0_17 = arith.constant 0 : index
    %c0_18 = arith.constant 0 : index
    %c0_19 = arith.constant 0 : index
    %19 = vector.load %arg6[%c1, %c0_17, %c0_18, %c0_19] : memref<3x1x32x8xbf16, #tpu.memory_space<vmem>>, vector<1x1x32x8xbf16>
    %20 = vector.shape_cast %19 : vector<1x1x32x8xbf16> to vector<32x8xbf16>
    %cst_20 = arith.constant dense<0.000000e+00> : vector<8x8xf32>
    %21 = tpu.matmul %8, %20, %cst_20 {dimension_numbers = #tpu.dot_dimension_numbers<[1], [0], [0], [1], [0, 0, 1, 1], [], []>} : vector<8x32xbf16>, vector<32x8xbf16>, vector<8x8xf32> -> vector<8x8xf32>
    %c1_21 = arith.constant 1 : index
    %c0_22 = arith.constant 0 : index
    %c0_23 = arith.constant 0 : index
    %c0_24 = arith.constant 0 : index
    %22 = vector.load %arg7[%c1_21, %c0_22, %c0_23, %c0_24] : memref<3x1x1x8xf32, #tpu.memory_space<vmem>>, vector<1x1x1x8xf32>
    %23 = vector.shape_cast %22 : vector<1x1x1x8xf32> to vector<1x8xf32>
    %24 = vector.broadcast %23 : vector<1x8xf32> to vector<8x8xf32>
    %25 = arith.addf %21, %24 : vector<8x8xf32>
    %c2 = arith.constant 2 : index
    %c0_25 = arith.constant 0 : index
    %c0_26 = arith.constant 0 : index
    %c0_27 = arith.constant 0 : index
    %26 = vector.load %arg6[%c2, %c0_25, %c0_26, %c0_27] : memref<3x1x32x8xbf16, #tpu.memory_space<vmem>>, vector<1x1x32x8xbf16>
    %27 = vector.shape_cast %26 : vector<1x1x32x8xbf16> to vector<32x8xbf16>
    %cst_28 = arith.constant dense<0.000000e+00> : vector<8x8xf32>
    %28 = tpu.matmul %11, %27, %cst_28 {dimension_numbers = #tpu.dot_dimension_numbers<[1], [0], [0], [1], [0, 0, 1, 1], [], []>} : vector<8x32xbf16>, vector<32x8xbf16>, vector<8x8xf32> -> vector<8x8xf32>
    %c2_29 = arith.constant 2 : index
    %c0_30 = arith.constant 0 : index
    %c0_31 = arith.constant 0 : index
    %c0_32 = arith.constant 0 : index
    %29 = vector.load %arg7[%c2_29, %c0_30, %c0_31, %c0_32] : memref<3x1x1x8xf32, #tpu.memory_space<vmem>>, vector<1x1x1x8xf32>
    %30 = vector.shape_cast %29 : vector<1x1x1x8xf32> to vector<1x8xf32>
    %31 = vector.broadcast %30 : vector<1x8xf32> to vector<8x8xf32>
    %32 = arith.addf %28, %31 : vector<8x8xf32>
    %33 = arith.truncf %18 : vector<8x8xf32> to vector<8x8xbf16>
    %34 = arith.truncf %25 : vector<8x8xf32> to vector<8x8xbf16>
    %cst_33 = arith.constant dense<0.000000e+00> : vector<8x8xf32>
    %35 = tpu.matmul %33, %34, %cst_33 {dimension_numbers = #tpu.dot_dimension_numbers<[1], [1], [0], [0], [0, 0, 1, 0], [], []>} : vector<8x8xbf16>, vector<8x8xbf16>, vector<8x8xf32> -> vector<8x8xf32>
    %cst_34 = arith.constant 0.353553385 : f32
    %36 = vector.broadcast %cst_34 : f32 to vector<8x8xf32>
    %37 = arith.mulf %35, %36 : vector<8x8xf32>
    %c0_35 = arith.constant 0 : index
    %c0_36 = arith.constant 0 : index
    %c0_37 = arith.constant 0 : index
    %38 = vector.load %arg5[%c0_35, %c0_36, %c0_37] : memref<1x8x8xbf16, #tpu.memory_space<vmem>>, vector<1x8x8xbf16>
    %39 = vector.shape_cast %38 : vector<1x8x8xbf16> to vector<8x8xbf16>
    %40 = arith.extf %39 : vector<8x8xbf16> to vector<8x8xf32>
    %41 = arith.addf %37, %40 : vector<8x8xf32>
    %cst_38 = arith.constant dense<0xFF800000> : vector<8xf32>
    %42 = vector.multi_reduction <maximumf>, %41, %cst_38 [1] : vector<8x8xf32> to vector<8xf32>
    %43 = vector.shape_cast %42 : vector<8xf32> to vector<8x1xf32>
    %44 = vector.broadcast %43 : vector<8x1xf32> to vector<8x8xf32>
    %45 = arith.subf %41, %44 : vector<8x8xf32>
    %46 = math.exp %45 : vector<8x8xf32>
    %cst_39 = arith.constant dense<0.000000e+00> : vector<8xf32>
    %47 = vector.multi_reduction <add>, %46, %cst_39 [1] : vector<8x8xf32> to vector<8xf32>
    %48 = vector.shape_cast %47 : vector<8xf32> to vector<8x1xf32>
    %49 = tpu.reciprocal %48 {approx = true} : vector<8x1xf32> -> vector<8x1xf32>
    %50 = vector.broadcast %49 : vector<8x1xf32> to vector<8x8xf32>
    %51 = arith.mulf %46, %50 : vector<8x8xf32>
    %c0_40 = arith.constant 0 : index
    %52 = arith.index_cast %arg1 : i32 to index
    %c0_41 = arith.constant 0 : index
    %c0_42 = arith.constant 0 : index
    %53 = vector.load %arg11[%c0_40, %52, %c0_41, %c0_42] : memref<1x4x8x8xf32, #tpu.memory_space<vmem>>, vector<1x1x8x8xf32>
    %54 = vector.shape_cast %53 : vector<1x1x8x8xf32> to vector<8x8xf32>
    %55 = vector.shape_cast %51 : vector<8x8xf32> to vector<1x1x8x8xf32>
    tpu.vector_store %arg11[%c0_40, %52, %c0_41, %c0_42], %55 {strides = array<i32>} : memref<1x4x8x8xf32, #tpu.memory_space<vmem>>, vector<1x1x8x8xf32>,
    %56 = arith.truncf %51 : vector<8x8xf32> to vector<8x8xbf16>
    %57 = arith.truncf %32 : vector<8x8xf32> to vector<8x8xbf16>
    %cst_43 = arith.constant dense<0.000000e+00> : vector<8x8xf32>
    %58 = tpu.matmul %56, %57, %cst_43 {dimension_numbers = #tpu.dot_dimension_numbers<[1], [0], [0], [1], [0, 0, 1, 1], [], []>} : vector<8x8xbf16>, vector<8x8xbf16>, vector<8x8xf32> -> vector<8x8xf32>
    %c0_44 = arith.constant 0 : index
    %c0_45 = arith.constant 0 : index
    %59 = vector.load %arg12[%c0_44, %c0_45] : memref<8x32xf32, #tpu.memory_space<vmem>>, vector<8x32xf32>
    %60 = arith.truncf %58 : vector<8x8xf32> to vector<8x8xbf16>
    %c0_46 = arith.constant 0 : index
    %c0_47 = arith.constant 0 : index
    %c0_48 = arith.constant 0 : index
    %61 = vector.load %arg8[%c0_46, %c0_47, %c0_48] : memref<1x8x32xbf16, #tpu.memory_space<vmem>>, vector<1x8x32xbf16>
    %62 = vector.shape_cast %61 : vector<1x8x32xbf16> to vector<8x32xbf16>
    %cst_49 = arith.constant dense<0.000000e+00> : vector<8x32xf32>
    %63 = tpu.matmul %60, %62, %cst_49 {dimension_numbers = #tpu.dot_dimension_numbers<[1], [0], [0], [1], [0, 0, 1, 1], [], []>} : vector<8x8xbf16>, vector<8x32xbf16>, vector<8x32xf32> -> vector<8x32xf32>
    %64 = arith.addf %59, %63 : vector<8x32xf32>
    %c0_50 = arith.constant 0 : index
    %c0_51 = arith.constant 0 : index
    %65 = vector.load %arg12[%c0_50, %c0_51] : memref<8x32xf32, #tpu.memory_space<vmem>>, vector<8x32xf32>
    tpu.vector_store %arg12[%c0_50, %c0_51], %64 {strides = array<i32>} : memref<8x32xf32, #tpu.memory_space<vmem>>, vector<8x32xf32>,
    %c3_i32 = arith.constant 3 : i32
    %66 = arith.cmpi eq, %arg1, %c3_i32 : i32
    %67 = arith.extui %66 : i1 to i32
    %c0_i32_52 = arith.constant 0 : i32
    %68 = arith.cmpi ne, %67, %c0_i32_52 : i32
    scf.if %68 {
      %c0_53 = arith.constant 0 : index
      %c0_54 = arith.constant 0 : index
      %69 = vector.load %arg12[%c0_53, %c0_54] : memref<8x32xf32, #tpu.memory_space<vmem>>, vector<8x32xf32>
      %c0_55 = arith.constant 0 : index
      %c0_56 = arith.constant 0 : index
      %70 = vector.load %arg9[%c0_55, %c0_56] : memref<1x32xf32, #tpu.memory_space<vmem>>, vector<1x32xf32>
      %71 = vector.broadcast %70 : vector<1x32xf32> to vector<8x32xf32>
      %72 = arith.addf %69, %71 : vector<8x32xf32>
      %c0_57 = arith.constant 0 : index
      %c0_58 = arith.constant 0 : index
      %c0_59 = arith.constant 0 : index
      %73 = vector.load %arg10[%c0_57, %c0_58, %c0_59] : memref<1x8x32xf32, #tpu.memory_space<vmem>>, vector<1x8x32xf32>
      %74 = vector.shape_cast %73 : vector<1x8x32xf32> to vector<8x32xf32>
      %75 = vector.shape_cast %72 : vector<8x32xf32> to vector<1x8x32xf32>
      tpu.vector_store %arg10[%c0_57, %c0_58, %c0_59], %75 {strides = array<i32>} : memref<1x8x32xf32, #tpu.memory_space<vmem>>, vector<1x8x32xf32>,
    } else {
    }
    return
  }
  func.func @transform_0(%arg0: i32, %arg1: i32) -> (i32, i32, i32) {
    %c0_i32 = arith.constant 0 : i32
    %c0_i32_0 = arith.constant 0 : i32
    %c0_i32_1 = arith.constant 0 : i32
    return %arg0, %c0_i32, %c0_i32_0 : i32, i32, i32
  }
  func.func @transform_1(%arg0: i32, %arg1: i32) -> (i32, i32, i32) {
    %c0_i32 = arith.constant 0 : i32
    %c0_i32_0 = arith.constant 0 : i32
    %c0_i32_1 = arith.constant 0 : i32
    return %arg0, %c0_i32, %c0_i32_0 : i32, i32, i32
  }
  func.func @transform_2(%arg0: i32, %arg1: i32) -> (i32, i32, i32) {
    %c0_i32 = arith.constant 0 : i32
    %c0_i32_0 = arith.constant 0 : i32
    %c0_i32_1 = arith.constant 0 : i32
    return %arg0, %c0_i32, %c0_i32_0 : i32, i32, i32
  }
  func.func @transform_3(%arg0: i32, %arg1: i32) -> (i32, i32, i32) {
    %c0_i32 = arith.constant 0 : i32
    %c0_i32_0 = arith.constant 0 : i32
    %c0_i32_1 = arith.constant 0 : i32
    return %arg0, %c0_i32, %c0_i32_0 : i32, i32, i32
  }
  func.func @transform_4(%arg0: i32, %arg1: i32) -> (i32, i32, i32, i32) {
    %c0_i32 = arith.constant 0 : i32
    %c0_i32_0 = arith.constant 0 : i32
    %c0_i32_1 = arith.constant 0 : i32
    %c0_i32_2 = arith.constant 0 : i32
    return %c0_i32, %arg1, %c0_i32_0, %c0_i32_1 : i32, i32, i32, i32
  }
  func.func @transform_5(%arg0: i32, %arg1: i32) -> (i32, i32, i32, i32) {
    %c0_i32 = arith.constant 0 : i32
    %c0_i32_0 = arith.constant 0 : i32
    %c0_i32_1 = arith.constant 0 : i32
    %c0_i32_2 = arith.constant 0 : i32
    return %c0_i32, %arg1, %c0_i32_0, %c0_i32_1 : i32, i32, i32, i32
  }
  func.func @transform_6(%arg0: i32, %arg1: i32) -> (i32, i32, i32) {
    %c0_i32 = arith.constant 0 : i32
    %c0_i32_0 = arith.constant 0 : i32
    %c0_i32_1 = arith.constant 0 : i32
    return %arg1, %c0_i32, %c0_i32_0 : i32, i32, i32
  }
  func.func @transform_7(%arg0: i32, %arg1: i32) -> (i32, i32) {
    %c0_i32 = arith.constant 0 : i32
    %c0_i32_0 = arith.constant 0 : i32
    %c0_i32_1 = arith.constant 0 : i32
    return %c0_i32, %c0_i32_0 : i32, i32
  }
  func.func @transform_8(%arg0: i32, %arg1: i32) -> (i32, i32, i32) {
    %c0_i32 = arith.constant 0 : i32
    %c0_i32_0 = arith.constant 0 : i32
    %c0_i32_1 = arith.constant 0 : i32
    return %arg0, %c0_i32, %c0_i32_0 : i32, i32, i32
  }
  func.func @transform_9(%arg0: i32, %arg1: i32) -> (i32, i32, i32, i32) {
    %c0_i32 = arith.constant 0 : i32
    %c0_i32_0 = arith.constant 0 : i32
    %c0_i32_1 = arith.constant 0 : i32
    %c0_i32_2 = arith.constant 0 : i32
    return %arg0, %c0_i32, %c0_i32_0, %c0_i32_1 : i32, i32, i32, i32
  }
}

</mosaic_0001>

<llo_original>
// kernel: tpu_custom_call.1
$region0: #{tpu_custom_call.1}
  #allocation0 [shape = 'u32[]', space=smem, size = 0x4, offset = 0x4, fixed_abs, tag = 'smem constant byte address 0x4 - core index']
  #allocation1 [shape = 'u32[72,128]{1,0:T(1,128)}', space=vmem, size = 0x9000, scoped, tag = 'internal scratch']
  #allocation2 [shape = 'f32[8,32]{1,0:T(8,128)}', space=vmem, size = 0x1000, scoped, tag = 'scratch operand']
  %s0 = inlined_call_operand.vmem [shape: f32[2,8,32], index: 0, kind: input, shape index: {}]
  %s1 = inlined_call_operand.vmem [shape: f32[2,8,32], index: 1, kind: input, shape index: {}]
  %s2 = inlined_call_operand.vmem [shape: f32[2,8,32], index: 2, kind: input, shape index: {}]
  %s3 = inlined_call_operand.vmem [shape: bf16[2,8,8], index: 3, kind: input, shape index: {}]
  %s4 = inlined_call_operand.vmem [shape: bf16[3,4,32,8], index: 4, kind: input, shape index: {}]
  %s5 = inlined_call_operand.vmem [shape: f32[3,4,1,8], index: 5, kind: input, shape index: {}]
  %s6 = inlined_call_operand.vmem [shape: bf16[4,8,32], index: 6, kind: input, shape index: {}]
  %s7 = inlined_call_operand.vmem [shape: f32[1,32], index: 7, kind: input, shape index: {}]
  %s8 = inlined_call_operand.hbm [shape: f32[2,8,32], index: 8, kind: output, shape index: {0}]
  %s9 = inlined_call_operand.hbm [shape: f32[2,4,8,8], index: 9, kind: output, shape index: {1}]
  %10 = xla_tuple %s8, %s9
  %s11 = sld [smem:[#allocation0]]
  $region156: #{tpu_custom_call.1} parent=0
    _
  %s13 = ssub.s32 1, %s11
  %s14 = scalar_select 0, %s13, %s11
  $region1: #{tpu_custom_call.1} parent=0
    #allocation3 [shape = 'u8[49152]{0}', space=vmem, size = 0xc000, scoped, tag = 'input window, operand 4']
    #allocation4 [shape = 'u8[3072]{0}', space=vmem, size = 0xc00, scoped, tag = 'input window, operand 5']
    #allocation5 [shape = 'u8[8192]{0}', space=vmem, size = 0x2000, scoped, tag = 'output window, operand 0']
    #allocation6 [shape = 's32[2]{0}', space=sflag, size = 0x8, scoped, tag = 'scoped memory for tpu_custom_call.1']
    #allocation7 [shape = 'u8[32768]{0}', space=vmem, size = 0x8000, scoped, tag = 'output window, operand 1']
    #allocation8 [shape = 's32[2]{0}', space=sflag, size = 0x8, scoped, tag = 'scoped memory for tpu_custom_call.1']
    %15 = vsyncpa [#allocation6], 0
    %s16 = scalar_lea.sflag [#allocation6], 1
    %17 = vsyncpa %s16, 0
    %18 = vsyncpa [#allocation8], 0
    %s19 = scalar_lea.sflag [#allocation8], 1
    %20 = vsyncpa %s19, 0
    loop: start=0, step=1, limit=10
    $region2: #{tpu_custom_call.1} parent=1 // loop_pre_header
      _
    $region3: #{tpu_custom_call.1} parent=1 // loop_header
      %s22 = sphi 0, %s26
      %p23 = scmp.ge.s32.totalorder %s22, 10
      %s29 = sphi 0, %s41
      %s30 = sphi 0, %s37
      %s31 = sphi 0, %s29
      %s32 = sphi 0, %s30
      %s33 = sphi 0, %s31
      %s34 = sphi 0, %s32
      %s44 = sphi 0, %s46
      %s47 = sphi 0, %s44
      %s48 = sphi 0, %s47
      %s64 = sphi 0, %s48
      %s70 = sphi 0, %s72
      %s73 = sphi 0, %s70
      %s74 = sphi 0, %s73
      %s90 = sphi 0, %s74
      %s96 = sphi 0, %s98
      %s99 = sphi 0, %s96
      %s100 = sphi 0, %s99
      %s116 = sphi 0, %s100
      %s122 = sphi 0, %s124
      %s125 = sphi 0, %s122
      %s126 = sphi 0, %s125
      %s142 = sphi 0, %s126
      %s148 = sphi 0, %s150
      %s151 = sphi 0, %s148
      %s152 = sphi 0, %s151
      %s168 = sphi 0, %s152
      %s174 = sphi 0, %s176
      %s177 = sphi 0, %s174
      %s178 = sphi 0, %s177
      %s194 = sphi 0, %s178
      %s200 = sphi 0, %s202
      %s203 = sphi 0, %s200
      %s204 = sphi 0, %s203
      %s220 = sphi 0, %s204
      %s224 = sphi 0, %s224
      %s226 = sphi 0, %s224
      %s227 = sphi 0, %s226
      %s241 = sphi 0, %s227
      %s247 = sphi 0, %s249
      %s250 = sphi 0, %s247
      %s251 = sphi 0, %s250
      %s267 = sphi 0, %s251
      %s273 = sphi 0, %s275
      %s276 = sphi 0, %s273
      %s277 = sphi 0, %s276
      %s293 = sphi 0, %s277
    $region4: #{tpu_custom_call.1} parent=1 // loop_header_branch
      %25 = sbr.rel (%p23) target = $region8
    $region5: #{tpu_custom_call.1} parent=1 // loop_body
      %s27 = ssub.s32 %s22, 1
      %s28 = ssub.s32 %s22, 2
      %s35 = sadd.s32 1, %s30
      %p36 = scmp.ge.s32.totalorder %s35, 4
      %s37 = scalar_select %p36, 0, %s35
      %s38 = sadd.s32 1, %s29
      %s39 = scalar_select %p36, %s38, %s29
      %p40 = scmp.ge.s32.totalorder %s39, 2
      %s41 = scalar_select %p40, 0, %s39
      %s42 = ssub.s32 %s29, %s41
      %p43 = scmp.eq.s32.totalorder %s42, 0
      %s45 = sadd.s32 %s44, 1
      %s46 = scalar_select %p43, %s44, %s45
      %p49 = pneg %p43
      %p50 = scmp.eq.s32.totalorder %s22, 7
      %p51 = por %p49, %p50
      %p52 = scmp.ne.s32.totalorder %s44, %s47
      %p53 = scmp.eq.s32.totalorder %s22, 0
      %p54 = por %p52, %p53
      %p55 = scmp.ne.s32.totalorder %s44, %s47
      %p56 = scmp.eq.s32.totalorder %s27, 7
      %p57 = por %p55, %p56
      %p58 = scmp.ne.s32.totalorder %s47, %s48
      %p59 = scmp.eq.s32.totalorder %s27, 0
      %p60 = por %p58, %p59
      %p61 = scmp.ne.s32.totalorder %s47, %s48
      %p62 = scmp.eq.s32.totalorder %s28, 7
      %p63 = por %p61, %p62
      %p65 = scmp.ne.s32.totalorder %s48, %s64
      %p66 = scmp.eq.s32.totalorder %s28, 0
      %p67 = por %p65, %p66
      %s68 = ssub.s32 %s29, %s41
      %p69 = scmp.eq.s32.totalorder %s68, 0
      %s71 = sadd.s32 %s70, 1
      %s72 = scalar_select %p69, %s70, %s71
      %p75 = pneg %p69
      %p76 = scmp.eq.s32.totalorder %s22, 7
      %p77 = por %p75, %p76
      %p78 = scmp.ne.s32.totalorder %s70, %s73
      %p79 = scmp.eq.s32.totalorder %s22, 0
      %p80 = por %p78, %p79
      %p81 = scmp.ne.s32.totalorder %s70, %s73
      %p82 = scmp.eq.s32.totalorder %s27, 7
      %p83 = por %p81, %p82
      %p84 = scmp.ne.s32.totalorder %s73, %s74
      %p85 = scmp.eq.s32.totalorder %s27, 0
      %p86 = por %p84, %p85
      %p87 = scmp.ne.s32.totalorder %s73, %s74
      %p88 = scmp.eq.s32.totalorder %s28, 7
      %p89 = por %p87, %p88
      %p91 = scmp.ne.s32.totalorder %s74, %s90
      %p92 = scmp.eq.s32.totalorder %s28, 0
      %p93 = por %p91, %p92
      %s94 = ssub.s32 %s29, %s41
      %p95 = scmp.eq.s32.totalorder %s94, 0
      %s97 = sadd.s32 %s96, 1
      %s98 = scalar_select %p95, %s96, %s97
      %p101 = pneg %p95
      %p102 = scmp.eq.s32.totalorder %s22, 7
      %p103 = por %p101, %p102
      %p104 = scmp.ne.s32.totalorder %s96, %s99
      %p105 = scmp.eq.s32.totalorder %s22, 0
      %p106 = por %p104, %p105
      %p107 = scmp.ne.s32.totalorder %s96, %s99
      %p108 = scmp.eq.s32.totalorder %s27, 7
      %p109 = por %p107, %p108
      %p110 = scmp.ne.s32.totalorder %s99, %s100
      %p111 = scmp.eq.s32.totalorder %s27, 0
      %p112 = por %p110, %p111
      %p113 = scmp.ne.s32.totalorder %s99, %s100
      %p114 = scmp.eq.s32.totalorder %s28, 7
      %p115 = por %p113, %p114
      %p117 = scmp.ne.s32.totalorder %s100, %s116
      %p118 = scmp.eq.s32.totalorder %s28, 0
      %p119 = por %p117, %p118
      %s120 = ssub.s32 %s29, %s41
      %p121 = scmp.eq.s32.totalorder %s120, 0
      %s123 = sadd.s32 %s122, 1
      %s124 = scalar_select %p121, %s122, %s123
      %p127 = pneg %p121
      %p128 = scmp.eq.s32.totalorder %s22, 7
      %p129 = por %p127, %p128
      %p130 = scmp.ne.s32.totalorder %s122, %s125
      %p131 = scmp.eq.s32.totalorder %s22, 0
      %p132 = por %p130, %p131
      %p133 = scmp.ne.s32.totalorder %s122, %s125
      %p134 = scmp.eq.s32.totalorder %s27, 7
      %p135 = por %p133, %p134
      %p136 = scmp.ne.s32.totalorder %s125, %s126
      %p137 = scmp.eq.s32.totalorder %s27, 0
      %p138 = por %p136, %p137
      %p139 = scmp.ne.s32.totalorder %s125, %s126
      %p140 = scmp.eq.s32.totalorder %s28, 7
      %p141 = por %p139, %p140
      %p143 = scmp.ne.s32.totalorder %s126, %s142
      %p144 = scmp.eq.s32.totalorder %s28, 0
      %p145 = por %p143, %p144
      %s146 = ssub.s32 %s30, %s37
      %p147 = scmp.eq.s32.totalorder %s146, 0
      %s149 = sadd.s32 %s148, 1
      %s150 = scalar_select %p147, %s148, %s149
      %p153 = pneg %p147
      %p154 = scmp.eq.s32.totalorder %s22, 7
      %p155 = por %p153, %p154
      %p156 = scmp.ne.s32.totalorder %s148, %s151
      %p157 = scmp.eq.s32.totalorder %s22, 0
      %p158 = por %p156, %p157
      %p159 = scmp.ne.s32.totalorder %s148, %s151
      %p160 = scmp.eq.s32.totalorder %s27, 7
      %p161 = por %p159, %p160
      %p162 = scmp.ne.s32.totalorder %s151, %s152
      %p163 = scmp.eq.s32.totalorder %s27, 0
      %p164 = por %p162, %p163
      %p165 = scmp.ne.s32.totalorder %s151, %s152
      %p166 = scmp.eq.s32.totalorder %s28, 7
      %p167 = por %p165, %p166
      %p169 = scmp.ne.s32.totalorder %s152, %s168
      %p170 = scmp.eq.s32.totalorder %s28, 0
      %p171 = por %p169, %p170
      %s172 = ssub.s32 %s30, %s37
      %p173 = scmp.eq.s32.totalorder %s172, 0
      %s175 = sadd.s32 %s174, 1
      %s176 = scalar_select %p173, %s174, %s175
      %p179 = pneg %p173
      %p180 = scmp.eq.s32.totalorder %s22, 7
      %p181 = por %p179, %p180
      %p182 = scmp.ne.s32.totalorder %s174, %s177
      %p183 = scmp.eq.s32.totalorder %s22, 0
      %p184 = por %p182, %p183
      %p185 = scmp.ne.s32.totalorder %s174, %s177
      %p186 = scmp.eq.s32.totalorder %s27, 7
      %p187 = por %p185, %p186
      %p188 = scmp.ne.s32.totalorder %s177, %s178
      %p189 = scmp.eq.s32.totalorder %s27, 0
      %p190 = por %p188, %p189
      %p191 = scmp.ne.s32.totalorder %s177, %s178
      %p192 = scmp.eq.s32.totalorder %s28, 7
      %p193 = por %p191, %p192
      %p195 = scmp.ne.s32.totalorder %s178, %s194
      %p196 = scmp.eq.s32.totalorder %s28, 0
      %p197 = por %p195, %p196
      %s198 = ssub.s32 %s30, %s37
      %p199 = scmp.eq.s32.totalorder %s198, 0
      %s201 = sadd.s32 %s200, 1
      %s202 = scalar_select %p199, %s200, %s201
      %p205 = pneg %p199
      %p206 = scmp.eq.s32.totalorder %s22, 7
      %p207 = por %p205, %p206
      %p208 = scmp.ne.s32.totalorder %s200, %s203
      %p209 = scmp.eq.s32.totalorder %s22, 0
      %p210 = por %p208, %p209
      %p211 = scmp.ne.s32.totalorder %s200, %s203
      %p212 = scmp.eq.s32.totalorder %s27, 7
      %p213 = por %p211, %p212
      %p214 = scmp.ne.s32.totalorder %s203, %s204
      %p215 = scmp.eq.s32.totalorder %s27, 0
      %p216 = por %p214, %p215
      %p217 = scmp.ne.s32.totalorder %s203, %s204
      %p218 = scmp.eq.s32.totalorder %s28, 7
      %p219 = por %p217, %p218
      %p221 = scmp.ne.s32.totalorder %s204, %s220
      %p222 = scmp.eq.s32.totalorder %s28, 0
      %p223 = por %p221, %p222
      %s225 = sadd.s32 %s224, 1
      %p228 = scmp.eq.s32.totalorder %s22, 7
      %p229 = scmp.ne.s32.totalorder %s224, %s226
      %p230 = scmp.eq.s32.totalorder %s22, 0
      %p231 = por %p229, %p230
      %p232 = scmp.ne.s32.totalorder %s224, %s226
      %p233 = scmp.eq.s32.totalorder %s27, 7
      %p234 = por %p232, %p233
      %p235 = scmp.ne.s32.totalorder %s226, %s227
      %p236 = scmp.eq.s32.totalorder %s27, 0
      %p237 = por %p235, %p236
      %p238 = scmp.ne.s32.totalorder %s226, %s227
      %p239 = scmp.eq.s32.totalorder %s28, 7
      %p240 = por %p238, %p239
      %p242 = scmp.ne.s32.totalorder %s227, %s241
      %p243 = scmp.eq.s32.totalorder %s28, 0
      %p244 = por %p242, %p243
      %s245 = ssub.s32 %s29, %s41
      %p246 = scmp.eq.s32.totalorder %s245, 0
      %s248 = sadd.s32 %s247, 1
      %s249 = scalar_select %p246, %s247, %s248
      %p252 = pneg %p246
      %p253 = scmp.eq.s32.totalorder %s22, 7
      %p254 = por %p252, %p253
      %p255 = scmp.ne.s32.totalorder %s247, %s250
      %p256 = scmp.eq.s32.totalorder %s22, 0
      %p257 = por %p255, %p256
      %p258 = scmp.ne.s32.totalorder %s247, %s250
      %p259 = scmp.eq.s32.totalorder %s27, 7
      %p260 = por %p258, %p259
      %p261 = scmp.ne.s32.totalorder %s250, %s251
      %p262 = scmp.eq.s32.totalorder %s27, 0
      %p263 = por %p261, %p262
      %p264 = scmp.ne.s32.totalorder %s250, %s251
      %p265 = scmp.eq.s32.totalorder %s28, 7
      %p266 = por %p264, %p265
      %p268 = scmp.ne.s32.totalorder %s251, %s267
      %p269 = scmp.eq.s32.totalorder %s28, 0
      %p270 = por %p268, %p269
      %s271 = ssub.s32 %s29, %s41
      %p272 = scmp.eq.s32.totalorder %s271, 0
      %s274 = sadd.s32 %s273, 1
      %s275 = scalar_select %p272, %s273, %s274
      %p278 = pneg %p272
      %p279 = scmp.eq.s32.totalorder %s22, 7
      %p280 = por %p278, %p279
      %p281 = scmp.ne.s32.totalorder %s273, %s276
      %p282 = scmp.eq.s32.totalorder %s22, 0
      %p283 = por %p281, %p282
      %p284 = scmp.ne.s32.totalorder %s273, %s276
      %p285 = scmp.eq.s32.totalorder %s27, 7
      %p286 = por %p284, %p285
      %p287 = scmp.ne.s32.totalorder %s276, %s277
      %p288 = scmp.eq.s32.totalorder %s27, 0
      %p289 = por %p287, %p288
      %p290 = scmp.ne.s32.totalorder %s276, %s277
      %p291 = scmp.eq.s32.totalorder %s28, 7
      %p292 = por %p290, %p291
      %p294 = scmp.ne.s32.totalorder %s277, %s293
      %p295 = scmp.eq.s32.totalorder %s28, 0
      %p296 = por %p294, %p295
      %p297 = scmp.le.s32.totalorder 1, %s22
      %p298 = scmp.lt.s32.totalorder %s22, 9
      %p299 = pnand %p297, %p298
      %p300 = pneg %p299
      // Predicated region
      $region9: #{tpu_custom_call.1} parent=5 // pred_check
        _
      $region10: #{tpu_custom_call.1} parent=5 // pred_check_branch
        %302 = sbr.rel (%p299) target = $region12
      $region11: #{tpu_custom_call.1} parent=5 // pred_region
        %s303 = ssub.s32 %s22, 1
        // Predicated region
        $region13: #{tpu_custom_call.1} parent=11 // pred_check
          %p304 = pneg %p237
        $region14: #{tpu_custom_call.1} parent=11 // pred_check_branch
          %306 = sbr.rel (%p304) target = $region16
        $region15: #{tpu_custom_call.1} parent=11 // pred_region
          _
        $region16: #{tpu_custom_call.1} parent=11 // pred_fallthru
          _
      $region12: #{tpu_custom_call.1} parent=5 // pred_fallthru
        _
      %p307 = scmp.lt.s32.totalorder %s22, 8
      // Predicated region
      $region17: #{tpu_custom_call.1} parent=5 // pred_check
        %p308 = pneg %p307
      $region18: #{tpu_custom_call.1} parent=5 // pred_check_branch
        %310 = sbr.rel (%p308) target = $region20
      $region19: #{tpu_custom_call.1} parent=5 // pred_region
        // Predicated region
        $region21: #{tpu_custom_call.1} parent=19 // pred_check
          %p311 = pneg %p54
        $region22: #{tpu_custom_call.1} parent=19 // pred_check_branch
          %313 = sbr.rel (%p311) target = $region24
        $region23: #{tpu_custom_call.1} parent=19 // pred_region
          %p314 = scmp.lt.s32.totalorder %s29, 1
          %s315 = scalar_select %p314, %s29, 1
          %s316 = smul.addr %s315, 8
          %s317 = scalar_lea.vmem %s0, %s316
        $region24: #{tpu_custom_call.1} parent=19 // pred_fallthru
          _
        // Predicated region
        $region25: #{tpu_custom_call.1} parent=19 // pred_check
          %p318 = pneg %p80
        $region26: #{tpu_custom_call.1} parent=19 // pred_check_branch
          %320 = sbr.rel (%p318) target = $region28
        $region27: #{tpu_custom_call.1} parent=19 // pred_region
          %p321 = scmp.lt.s32.totalorder %s29, 1
          %s322 = scalar_select %p321, %s29, 1
          %s323 = smul.addr %s322, 8
          %s324 = scalar_lea.vmem %s1, %s323
        $region28: #{tpu_custom_call.1} parent=19 // pred_fallthru
          _
        // Predicated region
        $region29: #{tpu_custom_call.1} parent=19 // pred_check
          %p325 = pneg %p106
        $region30: #{tpu_custom_call.1} parent=19 // pred_check_branch
          %327 = sbr.rel (%p325) target = $region32
        $region31: #{tpu_custom_call.1} parent=19 // pred_region
          %p328 = scmp.lt.s32.totalorder %s29, 1
          %s329 = scalar_select %p328, %s29, 1
          %s330 = smul.addr %s329, 8
          %s331 = scalar_lea.vmem %s2, %s330
        $region32: #{tpu_custom_call.1} parent=19 // pred_fallthru
          _
        // Predicated region
        $region33: #{tpu_custom_call.1} parent=19 // pred_check
          %p332 = pneg %p132
        $region34: #{tpu_custom_call.1} parent=19 // pred_check_branch
          %334 = sbr.rel (%p332) target = $region36
        $region35: #{tpu_custom_call.1} parent=19 // pred_region
          %p335 = scmp.lt.s32.totalorder %s29, 1
          %s336 = scalar_select %p335, %s29, 1
          %s337 = smul.addr %s336, 4
          %s338 = scalar_lea.vmem %s3, %s337
        $region36: #{tpu_custom_call.1} parent=19 // pred_fallthru
          _
        // Predicated region
        $region37: #{tpu_custom_call.1} parent=19 // pred_check
          %p339 = pneg %p158
        $region38: #{tpu_custom_call.1} parent=19 // pred_check_branch
          %341 = sbr.rel (%p339) target = $region40
        $region39: #{tpu_custom_call.1} parent=19 // pred_region
          %s342 = sand.u32 %s148, 1
          %s343 = sand.u32 %s148, 1
          %s344 = smul.addr %s343, 48
          %s345 = scalar_lea.vmem [#allocation3], %s344
          %s346 = smul.addr %s30, 4
          %s347 = smul.addr %s346, 4
          %s348 = scalar_lea.vmem %s4, %s347
          // Predicated region
          $region41: #{tpu_custom_call.1} parent=39 // pred_check
            _
          $region42: #{tpu_custom_call.1} parent=39 // pred_check_branch
            %350 = sbr.rel (0) target = $region44
          $region43: #{tpu_custom_call.1} parent=39 // pred_region
            // Predicated region
            $region45: #{tpu_custom_call.1} parent=43 // pred_check
              _
            $region46: #{tpu_custom_call.1} parent=43 // pred_check_branch
              %352 = sbr.rel target = $region48
            $region47: #{tpu_custom_call.1} parent=43 // pred_region
              // Predicated region
              $region60: #{tpu_custom_call.1} parent=47 // pred_check
                _
              $region61: #{tpu_custom_call.1} parent=47 // pred_check_branch
                %390 = sbr.rel (0) target = $region63
              $region62: #{tpu_custom_call.1} parent=47 // pred_region
                loop: start=0, step=1, limit=1
                $region64: #{tpu_custom_call.1} parent=62 // loop_pre_header
                  _
                $region65: #{tpu_custom_call.1} parent=62 // loop_header
                  %s392 = sphi 0, %s396
                  %p393 = scmp.ge.s32.totalorder %s392, 1
                  %s397 = sphi %s348, %s348
                  %s398 = sphi %s345, %s345
                $region66: #{tpu_custom_call.1} parent=62 // loop_header_branch
                  %395 = sbr.rel (%p393) target = $region70
                $region67: #{tpu_custom_call.1} parent=62 // loop_body
                  _
                $region68: #{tpu_custom_call.1} parent=62 // loop_footer
                  %s396 = sadd.s32 1, %s392
                $region69: #{tpu_custom_call.1} parent=62 // loop_footer_branch
                  %391 = sbr.rel target = $region65
                $region70: #{tpu_custom_call.1} parent=62 // loop_exit
                  _
                %s400 = ssub.s32 16, 1
                loop: start=0, step=1, limit=1
                $region71: #{tpu_custom_call.1} parent=62 // loop_pre_header
                  _
                $region72: #{tpu_custom_call.1} parent=62 // loop_header
                  %s402 = sphi 0, %s406
                  %p403 = scmp.ge.s32.totalorder %s402, 1
                  %s407 = sphi %s348, %s348
                  %s408 = sphi %s345, %s345
                $region73: #{tpu_custom_call.1} parent=62 // loop_header_branch
                  %405 = sbr.rel (%p403) target = $region77
                $region74: #{tpu_custom_call.1} parent=62 // loop_body
                  %v409 = vld [vmem:[%s407] sm:%s400]
                  %410 = vst [vmem:[%s408] sm:%s400] %v409
                  %v411 = vld [vmem:[%s407 + $0x4] sm:%s400]
                  %412 = vst [vmem:[%s408 + $0x4] sm:%s400] %v411
                  %v413 = vld [vmem:[%s407 + $0x8] sm:%s400]
                  %414 = vst [vmem:[%s408 + $0x8] sm:%s400] %v413
                  %v415 = vld [vmem:[%s407 + $0xc] sm:%s400]
                  %416 = vst [vmem:[%s408 + $0xc] sm:%s400] %v415
                  %v417 = vld [vmem:[%s407 + $0x40] sm:%s400]
                  %418 = vst [vmem:[%s408 + $0x10] sm:%s400] %v417
                  %v419 = vld [vmem:[%s407 + $0x44] sm:%s400]
                  %420 = vst [vmem:[%s408 + $0x14] sm:%s400] %v419
                  %v421 = vld [vmem:[%s407 + $0x48] sm:%s400]
                  %422 = vst [vmem:[%s408 + $0x18] sm:%s400] %v421
                  %v423 = vld [vmem:[%s407 + $0x4c] sm:%s400]
                  %424 = vst [vmem:[%s408 + $0x1c] sm:%s400] %v423
                  %v425 = vld [vmem:[%s407 + $0x80] sm:%s400]
                  %426 = vst [vmem:[%s408 + $0x20] sm:%s400] %v425
                  %v427 = vld [vmem:[%s407 + $0x84] sm:%s400]
                  %428 = vst [vmem:[%s408 + $0x24] sm:%s400] %v427
                  %v429 = vld [vmem:[%s407 + $0x88] sm:%s400]
                  %430 = vst [vmem:[%s408 + $0x28] sm:%s400] %v429
                  %v431 = vld [vmem:[%s407 + $0x8c] sm:%s400]
                  %432 = vst [vmem:[%s408 + $0x2c] sm:%s400] %v431
                $region75: #{tpu_custom_call.1} parent=62 // loop_footer
                  %s406 = sadd.s32 1, %s402
                $region76: #{tpu_custom_call.1} parent=62 // loop_footer_branch
                  %401 = sbr.rel target = $region72
                $region77: #{tpu_custom_call.1} parent=62 // loop_exit
                  _
              $region63: #{tpu_custom_call.1} parent=47 // pred_fallthru
                _
            $region48: #{tpu_custom_call.1} parent=43 // pred_fallthru
              _
            // Predicated region
            $region49: #{tpu_custom_call.1} parent=43 // pred_check
              _
            $region50: #{tpu_custom_call.1} parent=43 // pred_check_branch
              %354 = sbr.rel (0) target = $region52
            $region51: #{tpu_custom_call.1} parent=43 // pred_region
              %s356 = ssub.s32 16, 1
              loop: start=0, step=1, limit=1
              $region53: #{tpu_custom_call.1} parent=51 // loop_pre_header
                _
              $region54: #{tpu_custom_call.1} parent=51 // loop_header
                %s358 = sphi 0, %s362
                %p359 = scmp.ge.s32.totalorder %s358, 1
                %s363 = sphi %s348, %s348
                %s364 = sphi %s345, %s345
              $region55: #{tpu_custom_call.1} parent=51 // loop_header_branch
                %361 = sbr.rel (%p359) target = $region59
              $region56: #{tpu_custom_call.1} parent=51 // loop_body
                %v365 = vld [vmem:[%s363] sm:%s356]
                %366 = vst [vmem:[%s364] sm:%s356] %v365
                %v367 = vld [vmem:[%s363 + $0x4] sm:%s356]
                %368 = vst [vmem:[%s364 + $0x4] sm:%s356] %v367
                %v369 = vld [vmem:[%s363 + $0x8] sm:%s356]
                %370 = vst [vmem:[%s364 + $0x8] sm:%s356] %v369
                %v371 = vld [vmem:[%s363 + $0xc] sm:%s356]
                %372 = vst [vmem:[%s364 + $0xc] sm:%s356] %v371
                %v373 = vld [vmem:[%s363 + $0x40] sm:%s356]
                %374 = vst [vmem:[%s364 + $0x10] sm:%s356] %v373
                %v375 = vld [vmem:[%s363 + $0x44] sm:%s356]
                %376 = vst [vmem:[%s364 + $0x14] sm:%s356] %v375
                %v377 = vld [vmem:[%s363 + $0x48] sm:%s356]
                %378 = vst [vmem:[%s364 + $0x18] sm:%s356] %v377
                %v379 = vld [vmem:[%s363 + $0x4c] sm:%s356]
                %380 = vst [vmem:[%s364 + $0x1c] sm:%s356] %v379
                %v381 = vld [vmem:[%s363 + $0x80] sm:%s356]
                %382 = vst [vmem:[%s364 + $0x20] sm:%s356] %v381
                %v383 = vld [vmem:[%s363 + $0x84] sm:%s356]
                %384 = vst [vmem:[%s364 + $0x24] sm:%s356] %v383
                %v385 = vld [vmem:[%s363 + $0x88] sm:%s356]
                %386 = vst [vmem:[%s364 + $0x28] sm:%s356] %v385
                %v387 = vld [vmem:[%s363 + $0x8c] sm:%s356]
                %388 = vst [vmem:[%s364 + $0x2c] sm:%s356] %v387
              $region57: #{tpu_custom_call.1} parent=51 // loop_footer
                %s362 = sadd.s32 1, %s358
              $region58: #{tpu_custom_call.1} parent=51 // loop_footer_branch
                %357 = sbr.rel target = $region54
              $region59: #{tpu_custom_call.1} parent=51 // loop_exit
                _
            $region52: #{tpu_custom_call.1} parent=43 // pred_fallthru
              _
          $region44: #{tpu_custom_call.1} parent=39 // pred_fallthru
            _
          %433 = vnop
        $region40: #{tpu_custom_call.1} parent=19 // pred_fallthru
          _
        // Predicated region
        $region78: #{tpu_custom_call.1} parent=19 // pred_check
          %p434 = pneg %p184
        $region79: #{tpu_custom_call.1} parent=19 // pred_check_branch
          %436 = sbr.rel (%p434) target = $region81
        $region80: #{tpu_custom_call.1} parent=19 // pred_region
          %s437 = sand.u32 %s174, 1
          %s438 = sand.u32 %s174, 1
          %s439 = smul.addr %s438, 3
          %s440 = scalar_lea.vmem [#allocation4], %s439
          %s441 = scalar_lea.vmem %s5, %s30
          // Predicated region
          $region82: #{tpu_custom_call.1} parent=80 // pred_check
            _
          $region83: #{tpu_custom_call.1} parent=80 // pred_check_branch
            %443 = sbr.rel (0) target = $region85
          $region84: #{tpu_custom_call.1} parent=80 // pred_region
            // Predicated region
            $region86: #{tpu_custom_call.1} parent=84 // pred_check
              _
            $region87: #{tpu_custom_call.1} parent=84 // pred_check_branch
              %445 = sbr.rel target = $region89
            $region88: #{tpu_custom_call.1} parent=84 // pred_region
              // Predicated region
              $region101: #{tpu_custom_call.1} parent=88 // pred_check
                _
              $region102: #{tpu_custom_call.1} parent=88 // pred_check_branch
                %465 = sbr.rel (0) target = $region104
              $region103: #{tpu_custom_call.1} parent=88 // pred_region
                %s467 = ssub.s32 2, 1
                loop: start=0, step=1, limit=1
                $region105: #{tpu_custom_call.1} parent=103 // loop_pre_header
                  _
                $region106: #{tpu_custom_call.1} parent=103 // loop_header
                  %s469 = sphi 0, %s473
                  %p470 = scmp.ge.s32.totalorder %s469, 1
                  %s474 = sphi %s441, %s441
                  %s475 = sphi %s440, %s440
                $region107: #{tpu_custom_call.1} parent=103 // loop_header_branch
                  %472 = sbr.rel (%p470) target = $region111
                $region108: #{tpu_custom_call.1} parent=103 // loop_body
                  %v476 = vld [vmem:[%s474] sm:%s467]
                  %477 = vst [vmem:[%s475] sm:%s467] %v476
                  %v478 = vld [vmem:[%s474 + $0x4] sm:%s467]
                  %479 = vst [vmem:[%s475 + $0x1] sm:%s467] %v478
                  %v480 = vld [vmem:[%s474 + $0x8] sm:%s467]
                  %481 = vst [vmem:[%s475 + $0x2] sm:%s467] %v480
                $region109: #{tpu_custom_call.1} parent=103 // loop_footer
                  %s473 = sadd.s32 1, %s469
                $region110: #{tpu_custom_call.1} parent=103 // loop_footer_branch
                  %468 = sbr.rel target = $region106
                $region111: #{tpu_custom_call.1} parent=103 // loop_exit
                  _
              $region104: #{tpu_custom_call.1} parent=88 // pred_fallthru
                _
            $region89: #{tpu_custom_call.1} parent=84 // pred_fallthru
              _
            // Predicated region
            $region90: #{tpu_custom_call.1} parent=84 // pred_check
              _
            $region91: #{tpu_custom_call.1} parent=84 // pred_check_branch
              %447 = sbr.rel (0) target = $region93
            $region92: #{tpu_custom_call.1} parent=84 // pred_region
              %s449 = ssub.s32 2, 1
              loop: start=0, step=1, limit=1
              $region94: #{tpu_custom_call.1} parent=92 // loop_pre_header
                _
              $region95: #{tpu_custom_call.1} parent=92 // loop_header
                %s451 = sphi 0, %s455
                %p452 = scmp.ge.s32.totalorder %s451, 1
                %s456 = sphi %s441, %s441
                %s457 = sphi %s440, %s440
              $region96: #{tpu_custom_call.1} parent=92 // loop_header_branch
                %454 = sbr.rel (%p452) target = $region100
              $region97: #{tpu_custom_call.1} parent=92 // loop_body
                %v458 = vld [vmem:[%s456] sm:%s449]
                %459 = vst [vmem:[%s457] sm:%s449] %v458
                %v460 = vld [vmem:[%s456 + $0x4] sm:%s449]
                %461 = vst [vmem:[%s457 + $0x1] sm:%s449] %v460
                %v462 = vld [vmem:[%s456 + $0x8] sm:%s449]
                %463 = vst [vmem:[%s457 + $0x2] sm:%s449] %v462
              $region98: #{tpu_custom_call.1} parent=92 // loop_footer
                %s455 = sadd.s32 1, %s451
              $region99: #{tpu_custom_call.1} parent=92 // loop_footer_branch
                %450 = sbr.rel target = $region95
              $region100: #{tpu_custom_call.1} parent=92 // loop_exit
                _
            $region93: #{tpu_custom_call.1} parent=84 // pred_fallthru
              _
          $region85: #{tpu_custom_call.1} parent=80 // pred_fallthru
            _
          %482 = vnop
        $region81: #{tpu_custom_call.1} parent=19 // pred_fallthru
          _
        // Predicated region
        $region112: #{tpu_custom_call.1} parent=19 // pred_check
          %p483 = pneg %p210
        $region113: #{tpu_custom_call.1} parent=19 // pred_check_branch
          %485 = sbr.rel (%p483) target = $region115
        $region114: #{tpu_custom_call.1} parent=19 // pred_region
          %p486 = scmp.lt.s32.totalorder %s30, 3
          %s487 = scalar_select %p486, %s30, 3
          %s488 = smul.addr %s487, 4
          %s489 = scalar_lea.vmem %s6, %s488
        $region115: #{tpu_custom_call.1} parent=19 // pred_fallthru
          _
      $region20: #{tpu_custom_call.1} parent=5 // pred_fallthru
        _
      %p490 = scmp.le.s32.totalorder 1, %s22
      %p491 = scmp.lt.s32.totalorder %s22, 9
      %p492 = pnand %p490, %p491
      %p493 = pneg %p492
      // Predicated region
      $region116: #{tpu_custom_call.1} parent=5 // pred_check
        _
      $region117: #{tpu_custom_call.1} parent=5 // pred_check_branch
        %495 = sbr.rel (%p492) target = $region119
      $region118: #{tpu_custom_call.1} parent=5 // pred_region
        %s496 = ssub.s32 %s22, 1
        %s497 = sand.u32 %s151, 1
        %s498 = sand.u32 %s151, 1
        %s499 = smul.addr %s498, 48
        %s500 = scalar_lea.vmem [#allocation3], %s499
        // Predicated region
        $region120: #{tpu_custom_call.1} parent=118 // pred_check
          %p501 = pneg %p164
        $region121: #{tpu_custom_call.1} parent=118 // pred_check_branch
          %503 = sbr.rel (%p501) target = $region123
        $region122: #{tpu_custom_call.1} parent=118 // pred_region
          _
        $region123: #{tpu_custom_call.1} parent=118 // pred_fallthru
          _
        %s504 = sand.u32 %s177, 1
        %s505 = sand.u32 %s177, 1
        %s506 = smul.addr %s505, 3
        %s507 = scalar_lea.vmem [#allocation4], %s506
        // Predicated region
        $region124: #{tpu_custom_call.1} parent=118 // pred_check
          %p508 = pneg %p190
        $region125: #{tpu_custom_call.1} parent=118 // pred_check_branch
          %510 = sbr.rel (%p508) target = $region127
        $region126: #{tpu_custom_call.1} parent=118 // pred_region
          _
        $region127: #{tpu_custom_call.1} parent=118 // pred_fallthru
          _
        %p511 = scmp.lt.s32.totalorder %s31, 1
        %s512 = scalar_select %p511, %s31, 1
        %s513 = smul.addr %s512, 8
        %s514 = scalar_lea.vmem %s0, %s513
        %p515 = pneg %p60
        %p516 = pneg %p57
        %p517 = scmp.lt.s32.totalorder %s31, 1
        %s518 = scalar_select %p517, %s31, 1
        %s519 = smul.addr %s518, 8
        %s520 = scalar_lea.vmem %s1, %s519
        %p521 = pneg %p86
        %p522 = pneg %p83
        %p523 = scmp.lt.s32.totalorder %s31, 1
        %s524 = scalar_select %p523, %s31, 1
        %s525 = smul.addr %s524, 8
        %s526 = scalar_lea.vmem %s2, %s525
        %p527 = pneg %p112
        %p528 = pneg %p109
        %p529 = scmp.lt.s32.totalorder %s31, 1
        %s530 = scalar_select %p529, %s31, 1
        %s531 = smul.addr %s530, 4
        %s532 = scalar_lea.vmem %s3, %s531
        %p533 = pneg %p138
        %p534 = pneg %p135
        %s535 = sand.u32 %s151, 1
        %s536 = sand.u32 %s151, 1
        %s537 = smul.addr %s536, 48
        %s538 = scalar_lea.vmem [#allocation3], %s537
        %p539 = pneg %p164
        %p540 = pneg %p161
        %s541 = sand.u32 %s177, 1
        %s542 = sand.u32 %s177, 1
        %s543 = smul.addr %s542, 3
        %s544 = scalar_lea.vmem [#allocation4], %s543
        %p545 = pneg %p190
        %p546 = pneg %p187
        %p547 = scmp.lt.s32.totalorder %s32, 3
        %s548 = scalar_select %p547, %s32, 3
        %s549 = smul.addr %s548, 4
        %s550 = scalar_lea.vmem %s6, %s549
        %p551 = pneg %p216
        %p552 = pneg %p213
        %p553 = pneg %p237
        %p554 = pneg %p234
        %p555 = pneg %p263
        %p556 = pneg %p260
        %s557 = sand.u32 %s250, 1
        %s558 = scalar_lea.sflag [#allocation6], %s557
        %s559 = sand.u32 %s250, 1
        %s560 = smul.addr %s559, 8
        %s561 = scalar_lea.vmem [#allocation5], %s560
        %p562 = pneg %p289
        %p563 = pneg %p286
        %s564 = sand.u32 %s276, 1
        %s565 = scalar_lea.sflag [#allocation8], %s564
        %s566 = sand.u32 %s276, 1
        %s567 = smul.addr %s566, 32
        %s568 = scalar_lea.vmem [#allocation7], %s567
        %p569 = scmp.lt.s32.totalorder %s31, 1
        %s570 = scalar_select %p569, %s31, 1
        %s571 = smul.addr %s570, 8
        %s572 = scalar_lea.vmem %s0, %s571
        %p573 = scmp.lt.s32.totalorder %s31, 1
        %s574 = scalar_select %p573, %s31, 1
        %s575 = smul.addr %s574, 8
        %s576 = scalar_lea.vmem %s1, %s575
        %p577 = scmp.lt.s32.totalorder %s31, 1
        %s578 = scalar_select %p577, %s31, 1
        %s579 = smul.addr %s578, 8
        %s580 = scalar_lea.vmem %s2, %s579
        %p581 = scmp.lt.s32.totalorder %s31, 1
        %s582 = scalar_select %p581, %s31, 1
        %s583 = smul.addr %s582, 4
        %s584 = scalar_lea.vmem %s3, %s583
        %p585 = scmp.lt.s32.totalorder %s32, 3
        %s586 = scalar_select %p585, %s32, 3
        %s587 = smul.addr %s586, 4
        %s588 = scalar_lea.vmem %s6, %s587
        %p590 = scmp.eq.s32.totalorder %s32, 0
        // Predicated region
        $region128: #{tpu_custom_call.1} parent=118 // pred_check
          %p591 = pneg %p590
        $region129: #{tpu_custom_call.1} parent=118 // pred_check_branch
          %593 = sbr.rel (%p591) target = $region131
        $region130: #{tpu_custom_call.1} parent=118 // pred_region
          %vm594 = vcmask 261120
          %595 = vst.msk [vmem:[#allocation2] sm:$0xff] %vm594, 0.0
        $region131: #{tpu_custom_call.1} parent=118 // pred_fallthru
          _
        %v596 = vld [vmem:[%s572] sm:$0xff]
        %v597 = vpack.c.bf16 %v596, %v596
        %v598 = vld [vmem:[%s576] sm:$0xff]
        %v599 = vpack.c.bf16 %v598, %v598
        %v600 = vld [vmem:[%s580] sm:$0xff]
        %v601 = vpack.c.bf16 %v600, %v600
        %v602 = vld [vmem:[%s500] sm:$0xf]
        %v603 = vld [vmem:[%s500 + $0x4] sm:$0xf]
        %v604 = vld [vmem:[%s500 + $0x8] sm:$0xf]
        %v605 = vld [vmem:[%s500 + $0xc] sm:$0xf]
        %v606 = vld [vmem:[%s507] sm:$0x1]
        %v608 = vperm.slane %v606, 0
        %v614 = vunpack.c.l.b16 %v602
        %v615 = vunpack.c.l.b16 %v603
        %v616 = vunpack.c.l.b16 %v604
        %v617 = vunpack.c.l.b16 %v605
        %v618 = vpack.c.b16 %v615, %v614
        %v619 = vpack.c.b16 %v617, %v616
        %vm622 = vcmask 261120
        %v624 = vsel %vm622, %v597, 0
        %626 = vmatpush.bf16.msra.mxu0 0
        %627 = vmatpush.bf16.msra.mxu0 0
        %628 = vmatpush.bf16.msra.mxu0 0
        %629 = vmatpush.bf16.msra.mxu0 0
        %630 = vmatpush.bf16.msra.mxu0 0
        %631 = vmatpush.bf16.msra.mxu0 0
        %632 = vmatpush.bf16.msra.mxu0 %v619
        %633 = vmatpush.bf16.msra.mxu0 %v618
        %634 = vmatmul.bf16.gmra.mxu0 %v624
        %v635 = vpop.f32.mrf.mxu0
        %v636 = vadd.f32 %v608, %v635
        %v637 = vpop.f32.mrf.mxu0
        %638 = vdwg.mxu0
        %s639 = scalar_lea.vmem %s500, 16 [#allocation3]
        %v640 = vld [vmem:[%s639] sm:$0xf]
        %v641 = vld [vmem:[%s639 + $0x4] sm:$0xf]
        %v642 = vld [vmem:[%s639 + $0x8] sm:$0xf]
        %v643 = vld [vmem:[%s639 + $0xc] sm:$0xf]
        %s644 = scalar_lea.vmem %s507, 1 [#allocation4]
        %v645 = vld [vmem:[%s644] sm:$0x1]
        %v647 = vperm.slane %v645, 0
        %v653 = vunpack.c.l.b16 %v640
        %v654 = vunpack.c.l.b16 %v641
        %v655 = vunpack.c.l.b16 %v642
        %v656 = vunpack.c.l.b16 %v643
        %v657 = vpack.c.b16 %v654, %v653
        %v658 = vpack.c.b16 %v656, %v655
        %v662 = vsel %vm622, %v599, 0
        %664 = vmatpush.bf16.msra.mxu0 0
        %665 = vmatpush.bf16.msra.mxu0 0
        %666 = vmatpush.bf16.msra.mxu0 0
        %667 = vmatpush.bf16.msra.mxu0 0
        %668 = vmatpush.bf16.msra.mxu0 0
        %669 = vmatpush.bf16.msra.mxu0 0
        %670 = vmatpush.bf16.msra.mxu0 %v658
        %671 = vmatpush.bf16.msra.mxu0 %v657
        %672 = vmatmul.bf16.gmra.mxu0 %v662
        %v673 = vpop.f32.mrf.mxu0
        %v674 = vadd.f32 %v647, %v673
        %v675 = vpop.f32.mrf.mxu0
        %676 = vdwg.mxu0
        %s677 = scalar_lea.vmem %s500, 32 [#allocation3]
        %v678 = vld [vmem:[%s677] sm:$0xf]
        %v679 = vld [vmem:[%s677 + $0x4] sm:$0xf]
        %v680 = vld [vmem:[%s677 + $0x8] sm:$0xf]
        %v681 = vld [vmem:[%s677 + $0xc] sm:$0xf]
        %s682 = scalar_lea.vmem %s507, 2 [#allocation4]
        %v683 = vld [vmem:[%s682] sm:$0x1]
        %v685 = vperm.slane %v683, 0
        %v691 = vunpack.c.l.b16 %v678
        %v692 = vunpack.c.l.b16 %v679
        %v693 = vunpack.c.l.b16 %v680
        %v694 = vunpack.c.l.b16 %v681
        %v695 = vpack.c.b16 %v692, %v691
        %v696 = vpack.c.b16 %v694, %v693
        %v700 = vsel %vm622, %v601, 0
        %702 = vmatpush.bf16.msra.mxu0 0
        %703 = vmatpush.bf16.msra.mxu0 0
        %704 = vmatpush.bf16.msra.mxu0 0
        %705 = vmatpush.bf16.msra.mxu0 0
        %706 = vmatpush.bf16.msra.mxu0 0
        %707 = vmatpush.bf16.msra.mxu0 0
        %708 = vmatpush.bf16.msra.mxu0 %v696
        %709 = vmatpush.bf16.msra.mxu0 %v695
        %710 = vmatmul.bf16.gmra.mxu0 %v700
        %v711 = vpop.f32.mrf.mxu0
        %v712 = vadd.f32 %v685, %v711
        %v713 = vpop.f32.mrf.mxu0
        %714 = vdwg.mxu0
        %v715 = vpack.c.bf16 %v636, %v636
        %v716 = vpack.c.bf16 %v674, %v674
        %vm717 = vcmask 64512
        %v719 = vsel %vm717, %v715, 0
        %v722 = vsel %vm717, %v716, 0
        %724 = vmatpush.bf16.xpose.msra.mxu0 0
        %725 = vmatpush.bf16.xpose.msra.mxu0 0
        %726 = vmatpush.bf16.xpose.msra.mxu0 0
        %727 = vmatpush.bf16.xpose.msra.mxu0 0
        %728 = vmatpush.bf16.xpose.msra.mxu0 0
        %729 = vmatpush.bf16.xpose.msra.mxu0 0
        %730 = vmatpush.bf16.xpose.msra.mxu0 0
        %731 = vmatpush.bf16.xpose.msra.mxu0 %v722
        %732 = vmatmul.bf16.gmra.mxu0 %v719
        %v733 = vpop.f32.mrf.mxu0
        %v734 = vadd.f32 0.0, %v733
        %v735 = vpop.f32.mrf.mxu0
        %736 = vdwg.mxu0
        %v737 = vmul.f32 %v734, 0.35355338
        %v738 = vld [vmem:[%s584] sm:$0xf]
        %v739 = vunpack.c.l.bf16 %v738
        %v740 = vadd.f32 %v737, %v739
        %v741 = vsel %vm717, %v740, -inf
        %742 = vmax.xlane.f32.xlu0 %v741
        %v743 = vpop.xlane.xlu0 %742
        %v744 = vsub.f32 %v740, %v743
        %v745 = vmul.f32 %v744, 1.442695
        %v746 = vpow.pop %v745
        %v747 = vsel %vm717, %v746, 0.0
        %748 = vadd.xlane.f32.xlu0 %v747
        %v749 = vpop.xlane.xlu0 %748
        %v750 = vrcp.pop %v749
        %v751 = vmul.f32 %v746, %v750
        %s752 = smul.u32 %s32, 8
        %s753 = scalar_lea.vmem %s568, %s752 [#allocation7]
        %754 = vst.msk [vmem:[%s753] sm:$0xff] %vm717, %v751
        %v755 = vpack.c.bf16 %v751, %v751
        %v756 = vpack.c.bf16 %v712, %v712
        %v758 = vsel %vm717, %v755, 0
        %vm760 = vcmask 1043456
        %v762 = vsel %vm760, %v756, 0
        %764 = vmatpush.bf16.msra.mxu0 0
        %765 = vmatpush.bf16.msra.mxu0 0
        %766 = vmatpush.bf16.msra.mxu0 0
        %767 = vmatpush.bf16.msra.mxu0 0
        %768 = vmatpush.bf16.msra.mxu0 0
        %769 = vmatpush.bf16.msra.mxu0 0
        %770 = vmatpush.bf16.msra.mxu0 0
        %771 = vmatpush.bf16.msra.mxu0 %v762
        %772 = vmatmul.bf16.gmra.mxu0 %v758
        %v773 = vpop.f32.mrf.mxu0
        %v774 = vadd.f32 0.0, %v773
        %v775 = vpop.f32.mrf.mxu0
        %776 = vdwg.mxu0
        %v777 = vld [vmem:[#allocation2] sm:$0xff]
        %v778 = vpack.c.bf16 %v774, %v774
        %v779 = vld [vmem:[%s588] sm:$0xf]
        %v781 = vsel %vm717, %v778, 0
        %v784 = vsel %vm760, %v779, 0
        %786 = vmatpush.bf16.msra.mxu0 0
        %787 = vmatpush.bf16.msra.mxu0 0
        %788 = vmatpush.bf16.msra.mxu0 0
        %789 = vmatpush.bf16.msra.mxu0 0
        %790 = vmatpush.bf16.msra.mxu0 0
        %791 = vmatpush.bf16.msra.mxu0 0
        %792 = vmatpush.bf16.msra.mxu0 0
        %793 = vmatpush.bf16.msra.mxu0 %v784
        %794 = vmatmul.bf16.gmra.mxu0 %v781
        %v795 = vpop.f32.mrf.mxu0
        %v796 = vadd.f32 0.0, %v795
        %v797 = vpop.f32.mrf.mxu0
        %798 = vdwg.mxu0
        %v799 = vadd.f32 %v777, %v796
        %800 = vst.msk [vmem:[#allocation2] sm:$0xff] %vm622, %v799
        %p801 = scmp.eq.s32.totalorder %s32, 3
        // Predicated region
        $region132: #{tpu_custom_call.1} parent=118 // pred_check
          %p802 = pneg %p801
        $region133: #{tpu_custom_call.1} parent=118 // pred_check_branch
          %804 = sbr.rel (%p802) target = $region135
        $region134: #{tpu_custom_call.1} parent=118 // pred_region
          %v805 = vld [vmem:[#allocation2] sm:$0xff]
          %v806 = vld [vmem:[%s7] sm:$0x1]
          %v808 = vperm.slane %v806, 0
          %v810 = vadd.f32 %v805, %v808
          %811 = vst.msk [vmem:[%s561] sm:$0xff] %vm622, %v810
        $region135: #{tpu_custom_call.1} parent=118 // pred_fallthru
          _
        %s812 = sand.u32 %s250, 1
        %s813 = scalar_lea.sflag [#allocation6], %s812
        %s814 = sand.u32 %s250, 1
        %s815 = smul.addr %s814, 8
        %s816 = scalar_lea.vmem [#allocation5], %s815
        %s817 = sand.u32 %s276, 1
        %s818 = scalar_lea.sflag [#allocation8], %s817
        %s819 = sand.u32 %s276, 1
        %s820 = smul.addr %s819, 32
        %s821 = scalar_lea.vmem [#allocation7], %s820
        // Predicated region
        $region136: #{tpu_custom_call.1} parent=118 // pred_check
          %p822 = pneg %p260
        $region137: #{tpu_custom_call.1} parent=118 // pred_check_branch
          %824 = sbr.rel (%p822) target = $region139
        $region138: #{tpu_custom_call.1} parent=118 // pred_region
          %826 = vsyncadd %s813, 0
          %s827 = smul.addr %s31, 8
          %s828 = scalar_lea.hbm %s8, %s827
          %s830 = sshll.u32 %s816, 4
          %s831 = int_to_ptr.vmem [resolvable:$true] %s830
          %s832 = sshll.u32 %s828, 4
          %s833 = int_to_ptr.hbm [resolvable:$true] %s832
          %835 = dma.vmem_to_hbm [thread:$0]  %s831, 128, %s833, %s813
        $region139: #{tpu_custom_call.1} parent=118 // pred_fallthru
          _
        // Predicated region
        $region140: #{tpu_custom_call.1} parent=118 // pred_check
          %p836 = pneg %p286
        $region141: #{tpu_custom_call.1} parent=118 // pred_check_branch
          %838 = sbr.rel (%p836) target = $region143
        $region142: #{tpu_custom_call.1} parent=118 // pred_region
          %840 = vsyncadd %s818, 0
          %s841 = smul.addr %s31, 4
          %s842 = smul.addr %s841, 8
          %s843 = scalar_lea.hbm %s9, %s842
          %s844 = sshll.u32 %s821, 4
          %s845 = int_to_ptr.vmem [resolvable:$true] %s844
          %s846 = sshll.u32 %s843, 4
          %s847 = int_to_ptr.hbm [resolvable:$true] %s846
          %852 = dma.vmem_to_hbm [thread:$0]  %s845, 512, %s847, %s818, 128, 128, 8
        $region143: #{tpu_custom_call.1} parent=118 // pred_fallthru
          _
      $region119: #{tpu_custom_call.1} parent=5 // pred_fallthru
        _
      %p853 = scmp.le.s32.totalorder 2, %s22
      // Predicated region
      $region144: #{tpu_custom_call.1} parent=5 // pred_check
        %p854 = pneg %p853
      $region145: #{tpu_custom_call.1} parent=5 // pred_check_branch
        %856 = sbr.rel (%p854) target = $region147
      $region146: #{tpu_custom_call.1} parent=5 // pred_region
        %s857 = ssub.s32 %s22, 2
        // Predicated region
        $region148: #{tpu_custom_call.1} parent=146 // pred_check
          %p858 = pneg %p266
        $region149: #{tpu_custom_call.1} parent=146 // pred_check_branch
          %860 = sbr.rel (%p858) target = $region151
        $region150: #{tpu_custom_call.1} parent=146 // pred_region
          %s861 = sand.u32 %s251, 1
          %s862 = scalar_lea.sflag [#allocation6], %s861
          %s863 = sand.u32 %s251, 1
          %s864 = smul.addr %s863, 8
          %s865 = scalar_lea.vmem [#allocation5], %s864
          %867 = dma.done %s862, 128
        $region151: #{tpu_custom_call.1} parent=146 // pred_fallthru
          _
        // Predicated region
        $region152: #{tpu_custom_call.1} parent=146 // pred_check
          %p868 = pneg %p292
        $region153: #{tpu_custom_call.1} parent=146 // pred_check_branch
          %870 = sbr.rel (%p868) target = $region155
        $region154: #{tpu_custom_call.1} parent=146 // pred_region
          %s871 = sand.u32 %s277, 1
          %s872 = scalar_lea.sflag [#allocation8], %s871
          %s873 = sand.u32 %s277, 1
          %s874 = smul.addr %s873, 32
          %s875 = scalar_lea.vmem [#allocation7], %s874
          %877 = dma.done %s872, 512
        $region155: #{tpu_custom_call.1} parent=146 // pred_fallthru
          _
      $region147: #{tpu_custom_call.1} parent=5 // pred_fallthru
        _
    $region6: #{tpu_custom_call.1} parent=1 // loop_footer
      %s26 = sadd.s32 1, %s22
    $region7: #{tpu_custom_call.1} parent=1 // loop_footer_branch
      %21 = sbr.rel target = $region3
    $region8: #{tpu_custom_call.1} parent=1 // loop_exit
      _
    %878 = vsyncpa [#allocation6], 1
    %s879 = scalar_lea.sflag [#allocation6], 1
    %880 = vsyncpa %s879, 1
    %881 = vsyncpa [#allocation8], 1
    %s882 = scalar_lea.sflag [#allocation8], 1
    %883 = vsyncpa %s882, 1

</llo_original>
